<compile_context>
chip_gen: v5e
topology: v5e:2x2
jax: 0.10.0
libtpu: 0.0.40
codegen_flags: <defaults>
</compile_context>

<pallas_src>
import jax
import jax.numpy as jnp
from jax import lax
from jax.experimental import pallas as pl
from jax.experimental.pallas import tpu as pltpu


def _transition_kernel(x_ref, w_ref, b_ref, o_ref, y_scr):
    # x_ref : (1, C_in, 2*TL)    input block, NCL layout (length on lanes)
    # w_ref : (C_out_pad, C_in)  1x1-conv weight (PyTorch layout, rows padded)
    # b_ref : (1, C_out_pad)     bias (f32)
    # o_ref : (1, C_out, TL)     output block, NCL' layout (length on lanes)
    # y_scr : (2*TL, C_out_pad)  f32 scratch: raw conv output, length on sublanes
    c_out = o_ref.shape[1]
    tl = o_ref.shape[2]

    x = x_ref[0]                                     # (C_in, 2*TL)

    # 1x1 conv at every length position.  Canonical (M,K)@(K,N) contraction:
    # no implicit transpose of either operand on the MXU path.
    y = lax.dot_general(
        w_ref[...], x,
        dimension_numbers=(((1,), (0,)), ((), ())),
        preferred_element_type=jnp.float32)          # (C_out_pad, 2*TL)

    # Put length on the sublane axis for the strided pooling reads.
    y_scr[...] = jnp.transpose(y)                    # (2*TL, C_out_pad)

    # MaxPool1d(kernel=2, stride=2): pairwise max via sublane-strided loads.
    y_even = y_scr[pl.ds(0, tl, stride=2), :]        # rows 0, 2, 4, ...
    y_odd = y_scr[pl.ds(1, tl, stride=2), :]         # rows 1, 3, 5, ...
    z = jnp.maximum(y_even, y_odd)                   # (TL, C_out_pad)

    # Bias + ReLU after the pool (exact; half the elementwise work).
    z = jnp.maximum(z + b_ref[...], 0.0)

    # Drop the padded channels before the transpose, back to channels-major.
    zt = jnp.transpose(z[:, :c_out])                 # (C_out, TL)
    o_ref[0] = zt.astype(o_ref.dtype)


def transition_block(x, weight, bias, *, tile_l_max=2048, input_buffers=2):
    """TransitionBlock forward: MaxPool1d(2,2)(ReLU(Conv1d_k1(x))).

    x:      (N, C_in, L)      activations (NCL, like PyTorch Conv1d)
    weight: (C_out, C_in, 1)  Conv1d kernel-size-1 weight
    bias:   (C_out,)
    returns (N, C_out, L // 2), dtype of x.
    """
    n, c_in, length = x.shape
    c_out = weight.shape[0]
    l_out = length // 2
    if l_out == 0:
        return jnp.zeros((n, c_out, 0), x.dtype)

    itemsize = jnp.dtype(x.dtype).itemsize
    c_out_p = ((c_out + 127) // 128) * 128

    # Weight in its natural (C_out, C_in) layout, rows zero-padded to C_out_pad,
    # cast to the activation dtype (bf16 x bf16 -> f32 accumulate on the MXU).
    w_p = jnp.pad(weight[:, :, 0], ((0, c_out_p - c_out), (0, 0))).astype(x.dtype)
    b_p = jnp.pad(bias.astype(jnp.float32), (0, c_out_p - c_out)).reshape(1, c_out_p)

    # ---- L-tile selection (corrected VMEM accounting) ----------------------
    per_tl = (2 * (2 * c_in * itemsize)    # x block (1, C_in, 2*TL), double-buffered
              + 2 * (c_out * itemsize)     # out block (1, C_out, TL), double-buffered
              + 2 * c_out_p * 4            # f32 scratch (2*TL, C_out_pad)
              + 2 * c_out_p * 4)           # f32 matmul-result temp (C_out_pad, 2*TL)
    resident = 2 * (c_in * c_out_p * itemsize + c_out_p * 4)   # weight + bias

    try:   # physical VMEM per TensorCore (128 MiB v5e/v6e, 64 MiB v7x)
        vmem_cap = int(getattr(pltpu.get_tpu_info(), "vmem_capacity_bytes",
                               64 * 1024 * 1024))
    except Exception:
        vmem_cap = 64 * 1024 * 1024
    budget = max(4 * 1024 * 1024, vmem_cap // 3 - resident)

    tl = max(128, min(int(tile_l_max), budget // per_tl // 128 * 128))
    if l_out <= tl:
        tl = l_out                      # single tile: full (possibly unaligned) L
    # Odd L: keep the 2*TL block width 128-aligned so no wrapper copy is needed
    # (valid outputs never read the dropped trailing element).
    if length != 2 * l_out and tl % 128 != 0 and l_out >= 128:
        tl = (min(tl, l_out) // 128) * 128
    num_l_tiles = pl.cdiv(l_out, tl)
    # Keep enough grid steps so both v7x TensorCores get work.
    while n * num_l_tiles < 8 and tl > 256:
        tl = max(256, (tl // 2) // 128 * 128)
        num_l_tiles = pl.cdiv(l_out, tl)

    x_in = x
    if length != 2 * l_out and (2 * tl) % 128 != 0:
        # Tiny odd-L fallback only: slice keeps the block shape tile-compliant.
        x_in = x[:, :, : 2 * l_out]

    x_spec_kwargs = {}
    if int(input_buffers) != 2:
        x_spec_kwargs["pipeline_mode"] = pl.Buffered(int(input_buffers))
    x_spec = pl.BlockSpec((1, c_in, 2 * tl), lambda i, j: (i, 0, j),
                          **x_spec_kwargs)

    cost = pl.CostEstimate(
        flops=2 * n * (2 * l_out) * c_in * c_out,
        transcendentals=0,
        bytes_accessed=(n * c_in * length * itemsize
                        + n * c_out * l_out * itemsize
                        + c_in * c_out_p * itemsize + 4 * c_out_p))

    vmem_limit = int(max(32 * 1024 * 1024,
                         min(vmem_cap * 3 // 4,
                             per_tl * tl + resident + (16 << 20))))

    out = pl.pallas_call(
        _transition_kernel,
        out_shape=jax.ShapeDtypeStruct((n, c_out, l_out), x.dtype),
        grid_spec=pltpu.PrefetchScalarGridSpec(
            num_scalar_prefetch=0,
            grid=(n, num_l_tiles),
            in_specs=[
                x_spec,
                pl.BlockSpec((c_out_p, c_in), lambda i, j: (0, 0)),   # resident
                pl.BlockSpec((1, c_out_p), lambda i, j: (0, 0)),      # resident
            ],
            out_specs=pl.BlockSpec((1, c_out, tl), lambda i, j: (i, 0, j)),
            scratch_shapes=[pltpu.VMEM((2 * tl, c_out_p), jnp.float32)],
        ),
        compiler_params=pltpu.CompilerParams(
            dimension_semantics=("parallel", "parallel"),
            vmem_limit_bytes=vmem_limit),
        cost_estimate=cost,
    )(x_in, w_p, b_p)
    return out


def _reference(x, weight, bias):
    # plain-JAX reference of the PyTorch forward
    w = weight[:, :, 0]                                          # (C_out, C_in)
    y = jnp.einsum("ncl,oc->nol", x, w) + bias[None, :, None]    # conv1d k=1
    y = jnp.maximum(y, 0.0)                                      # ReLU
    l_out = y.shape[-1] // 2
    y = y[:, :, : 2 * l_out].reshape(y.shape[0], y.shape[1], l_out, 2)
    return jnp.max(y, axis=-1)                                   # MaxPool1d(2,2)


if __name__ == "__main__":
    key = jax.random.PRNGKey(0)

    def run_case(n, c_in, c_out, length, **kw):
        k1, k2, k3 = jax.random.split(
            jax.random.fold_in(key, 131 * length + 7 * c_in + c_out), 3)
        x = jax.random.normal(k1, (n, c_in, length), dtype=jnp.float32)
        w = jax.random.normal(k2, (c_out, c_in, 1), dtype=jnp.float32) * 0.1
        b = jax.random.normal(k3, (c_out,), dtype=jnp.float32) * 0.1
        out = jax.block_until_ready(transition_block(x, w, b, **kw))
        ref = _reference(x, w, b)
        assert out.shape == (n, c_out, length // 2), out.shape
        assert jnp.allclose(out, ref, atol=1e-5, rtol=1e-5), (
            f"mismatch vs reference for case {(n, c_in, c_out, length)}")

    run_case(2, 4, 6, 16)                    # basic small case
    run_case(2, 4, 6, 17)                    # odd L (MaxPool1d floor semantics)
    run_case(2, 8, 4, 612, tile_l_max=128)   # multi-tile grid with partial last tile
    print("KERNEL_OK")
</pallas_src>

<mosaic_0001>
module attributes {stable_mosaic.version = 11 : i64} {
  func.func @_transition_kernel(%arg0: i32, %arg1: i32, %arg2: memref<1x4x16xf32, #tpu.memory_space<vmem>>, %arg3: memref<128x4xf32, #tpu.memory_space<vmem>>, %arg4: memref<1x128xf32, #tpu.memory_space<vmem>>, %arg5: memref<1x6x8xf32, #tpu.memory_space<vmem>>, %arg6: memref<16x128xf32, #tpu.memory_space<vmem>>) attributes {dimension_semantics = [#tpu.dimension_semantics<parallel>, #tpu.dimension_semantics<parallel>], iteration_bounds = array<i64: 2, 1>, scalar_prefetch = 0 : i64, scratch_operands = 1 : i64, tpu.core_type = #tpu.core_type<tc>, window_params = [{transform_indices = @transform_0, window_bounds = array<i64: 1, 4, 16>}, {pipeline_mode = #tpu.pipeline_mode<synchronous>, transform_indices = @transform_1, window_bounds = array<i64: 128, 4>}, {pipeline_mode = #tpu.pipeline_mode<synchronous>, transform_indices = @transform_2, window_bounds = array<i64: 1, 128>}, {transform_indices = @transform_3, window_bounds = array<i64: 1, 6, 8>}]} {
    %c0 = arith.constant 0 : index
    %c0_0 = arith.constant 0 : index
    %c0_1 = arith.constant 0 : index
    %0 = vector.load %arg2[%c0, %c0_0, %c0_1] : memref<1x4x16xf32, #tpu.memory_space<vmem>>, vector<1x4x16xf32>
    %1 = vector.shape_cast %0 : vector<1x4x16xf32> to vector<4x16xf32>
    %c0_2 = arith.constant 0 : index
    %c0_3 = arith.constant 0 : index
    %2 = vector.load %arg3[%c0_2, %c0_3] : memref<128x4xf32, #tpu.memory_space<vmem>>, vector<128x4xf32>
    %cst = arith.constant dense<0.000000e+00> : vector<128x16xf32>
    %3 = tpu.matmul %2, %1, %cst {dimension_numbers = #tpu.dot_dimension_numbers<[1], [0], [0], [1], [0, 0, 1, 1], [], []>} : vector<128x4xf32>, vector<4x16xf32>, vector<128x16xf32> -> vector<128x16xf32>
    %4 = tpu.transpose %3, [1, 0] : vector<128x16xf32> -> vector<16x128xf32>
    %c0_4 = arith.constant 0 : index
    %c0_5 = arith.constant 0 : index
    %5 = vector.load %arg6[%c0_4, %c0_5] : memref<16x128xf32, #tpu.memory_space<vmem>>, vector<16x128xf32>
    tpu.vector_store %arg6[%c0_4, %c0_5], %4 {strides = array<i32>} : memref<16x128xf32, #tpu.memory_space<vmem>>, vector<16x128xf32>,
    %c0_6 = arith.constant 0 : index
    %c0_7 = arith.constant 0 : index
    %6 = tpu.strided_load %arg6[%c0_6, %c0_7] {strides = array<i32: 2, 1>} : memref<16x128xf32, #tpu.memory_space<vmem>>, vector<8x128xf32>
    %c1 = arith.constant 1 : index
    %c0_8 = arith.constant 0 : index
    %7 = tpu.strided_load %arg6[%c1, %c0_8] {strides = array<i32: 2, 1>} : memref<16x128xf32, #tpu.memory_space<vmem>>, vector<8x128xf32>
    %8 = arith.maximumf %6, %7 : vector<8x128xf32>
    %c0_9 = arith.constant 0 : index
    %c0_10 = arith.constant 0 : index
    %9 = vector.load %arg4[%c0_9, %c0_10] : memref<1x128xf32, #tpu.memory_space<vmem>>, vector<1x128xf32>
    %10 = vector.broadcast %9 : vector<1x128xf32> to vector<8x128xf32>
    %11 = arith.addf %8, %10 : vector<8x128xf32>
    %cst_11 = arith.constant 0.000000e+00 : f32
    %12 = vector.broadcast %cst_11 : f32 to vector<8x128xf32>
    %13 = arith.maximumf %11, %12 : vector<8x128xf32>
    %14 = vector.extract_strided_slice %13 {offsets = [0, 0], sizes = [8, 6], strides = [1, 1]} : vector<8x128xf32> to vector<8x6xf32>
    %15 = tpu.transpose %14, [1, 0] : vector<8x6xf32> -> vector<6x8xf32>
    %c0_12 = arith.constant 0 : index
    %c0_13 = arith.constant 0 : index
    %c0_14 = arith.constant 0 : index
    %16 = vector.load %arg5[%c0_12, %c0_13, %c0_14] : memref<1x6x8xf32, #tpu.memory_space<vmem>>, vector<1x6x8xf32>
    %17 = vector.shape_cast %16 : vector<1x6x8xf32> to vector<6x8xf32>
    %18 = vector.shape_cast %15 : vector<6x8xf32> to vector<1x6x8xf32>
    tpu.vector_store %arg5[%c0_12, %c0_13, %c0_14], %18 {strides = array<i32>} : memref<1x6x8xf32, #tpu.memory_space<vmem>>, vector<1x6x8xf32>,
    return
  }
  func.func @transform_0(%arg0: i32, %arg1: i32) -> (i32, i32, i32) {
    %c0_i32 = arith.constant 0 : i32
    %c0_i32_0 = arith.constant 0 : i32
    return %arg0, %c0_i32, %arg1 : i32, i32, i32
  }
  func.func @transform_1(%arg0: i32, %arg1: i32) -> (i32, i32) {
    %c0_i32 = arith.constant 0 : i32
    %c0_i32_0 = arith.constant 0 : i32
    %c0_i32_1 = arith.constant 0 : i32
    return %c0_i32, %c0_i32_0 : i32, i32
  }
  func.func @transform_2(%arg0: i32, %arg1: i32) -> (i32, i32) {
    %c0_i32 = arith.constant 0 : i32
    %c0_i32_0 = arith.constant 0 : i32
    %c0_i32_1 = arith.constant 0 : i32
    return %c0_i32, %c0_i32_0 : i32, i32
  }
  func.func @transform_3(%arg0: i32, %arg1: i32) -> (i32, i32, i32) {
    %c0_i32 = arith.constant 0 : i32
    %c0_i32_0 = arith.constant 0 : i32
    return %arg0, %c0_i32, %arg1 : i32, i32, i32
  }
}

</mosaic_0001>

<llo_original>
// kernel: tpu_custom_call.1
$region0: #{tpu_custom_call.1}
  #allocation0 [shape = 'u32[]', space=smem, size = 0x4, offset = 0x4, fixed_abs, tag = 'smem constant byte address 0x4 - core index']
  #allocation1 [shape = 'u32[72,128]{1,0:T(1,128)}', space=vmem, size = 0x9000, scoped, tag = 'internal scratch']
  #allocation2 [shape = 'f32[16,128]{1,0:T(8,128)}', space=vmem, size = 0x2000, scoped, tag = 'scratch operand']
  %s0 = inlined_call_operand.vmem [shape: f32[2,4,16], index: 0, kind: input, shape index: {}]
  %s1 = inlined_call_operand.vmem [shape: f32[128,4], index: 1, kind: input, shape index: {}]
  %s2 = inlined_call_operand.vmem [shape: f32[1,128], index: 2, kind: input, shape index: {}]
  %s3 = inlined_call_operand.vmem [shape: f32[2,6,8], index: 3, kind: output, shape index: {}]
  %s4 = sld [smem:[#allocation0]]
  $region45: #{tpu_custom_call.1} parent=0
    _
  %s6 = ssub.s32 1, %s4
  %s7 = scalar_select 0, %s6, %s4
  loop: start=0, step=1, limit=4
  $region2: #{tpu_custom_call.1} parent=0 // loop_pre_header
    _
  $region3: #{tpu_custom_call.1} parent=0 // loop_header
    %s9 = sphi 0, %s13
    %p10 = scmp.ge.s32.totalorder %s9, 4
    %s16 = sphi 0, %s28
    %s17 = sphi 0, %s24
    %s18 = sphi 0, %s16
    %s19 = sphi 0, %s17
    %s20 = sphi 0, %s18
    %s21 = sphi 0, %s19
    %s33 = sphi 0, %s35
    %s36 = sphi 0, %s33
    %s37 = sphi 0, %s36
    %s53 = sphi 0, %s37
    %s57 = sphi 0, %s57
    %s59 = sphi 0, %s57
    %s60 = sphi 0, %s59
    %s74 = sphi 0, %s60
    %s78 = sphi 0, %s78
    %s80 = sphi 0, %s78
    %s81 = sphi 0, %s80
    %s95 = sphi 0, %s81
    %s103 = sphi 0, %s105
    %s106 = sphi 0, %s103
    %s107 = sphi 0, %s106
    %s123 = sphi 0, %s107
  $region4: #{tpu_custom_call.1} parent=0 // loop_header_branch
    %12 = sbr.rel (%p10) target = $region8
  $region5: #{tpu_custom_call.1} parent=0 // loop_body
    %s14 = ssub.s32 %s9, 1
    %s15 = ssub.s32 %s9, 2
    %s22 = sadd.s32 1, %s17
    %p23 = scmp.ge.s32.totalorder %s22, 1
    %s24 = scalar_select %p23, 0, %s22
    %s25 = sadd.s32 1, %s16
    %s26 = scalar_select %p23, %s25, %s16
    %p27 = scmp.ge.s32.totalorder %s26, 2
    %s28 = scalar_select %p27, 0, %s26
    %s29 = ssub.s32 %s16, %s28
    %s30 = ssub.s32 %s17, %s24
    %s31 = sor.u32 %s29, %s30
    %p32 = scmp.eq.s32.totalorder %s31, 0
    %s34 = sadd.s32 %s33, 1
    %s35 = scalar_select %p32, %s33, %s34
    %p38 = pneg %p32
    %p39 = scmp.eq.s32.totalorder %s9, 1
    %p40 = por %p38, %p39
    %p41 = scmp.ne.s32.totalorder %s33, %s36
    %p42 = scmp.eq.s32.totalorder %s9, 0
    %p43 = por %p41, %p42
    %p44 = scmp.ne.s32.totalorder %s33, %s36
    %p45 = scmp.eq.s32.totalorder %s14, 1
    %p46 = por %p44, %p45
    %p47 = scmp.ne.s32.totalorder %s36, %s37
    %p48 = scmp.eq.s32.totalorder %s14, 0
    %p49 = por %p47, %p48
    %p50 = scmp.ne.s32.totalorder %s36, %s37
    %p51 = scmp.eq.s32.totalorder %s15, 1
    %p52 = por %p50, %p51
    %p54 = scmp.ne.s32.totalorder %s37, %s53
    %p55 = scmp.eq.s32.totalorder %s15, 0
    %p56 = por %p54, %p55
    %s58 = sadd.s32 %s57, 1
    %p61 = scmp.eq.s32.totalorder %s9, 1
    %p62 = scmp.ne.s32.totalorder %s57, %s59
    %p63 = scmp.eq.s32.totalorder %s9, 0
    %p64 = por %p62, %p63
    %p65 = scmp.ne.s32.totalorder %s57, %s59
    %p66 = scmp.eq.s32.totalorder %s14, 1
    %p67 = por %p65, %p66
    %p68 = scmp.ne.s32.totalorder %s59, %s60
    %p69 = scmp.eq.s32.totalorder %s14, 0
    %p70 = por %p68, %p69
    %p71 = scmp.ne.s32.totalorder %s59, %s60
    %p72 = scmp.eq.s32.totalorder %s15, 1
    %p73 = por %p71, %p72
    %p75 = scmp.ne.s32.totalorder %s60, %s74
    %p76 = scmp.eq.s32.totalorder %s15, 0
    %p77 = por %p75, %p76
    %s79 = sadd.s32 %s78, 1
    %p82 = scmp.eq.s32.totalorder %s9, 1
    %p83 = scmp.ne.s32.totalorder %s78, %s80
    %p84 = scmp.eq.s32.totalorder %s9, 0
    %p85 = por %p83, %p84
    %p86 = scmp.ne.s32.totalorder %s78, %s80
    %p87 = scmp.eq.s32.totalorder %s14, 1
    %p88 = por %p86, %p87
    %p89 = scmp.ne.s32.totalorder %s80, %s81
    %p90 = scmp.eq.s32.totalorder %s14, 0
    %p91 = por %p89, %p90
    %p92 = scmp.ne.s32.totalorder %s80, %s81
    %p93 = scmp.eq.s32.totalorder %s15, 1
    %p94 = por %p92, %p93
    %p96 = scmp.ne.s32.totalorder %s81, %s95
    %p97 = scmp.eq.s32.totalorder %s15, 0
    %p98 = por %p96, %p97
    %s99 = ssub.s32 %s16, %s28
    %s100 = ssub.s32 %s17, %s24
    %s101 = sor.u32 %s99, %s100
    %p102 = scmp.eq.s32.totalorder %s101, 0
    %s104 = sadd.s32 %s103, 1
    %s105 = scalar_select %p102, %s103, %s104
    %p108 = pneg %p102
    %p109 = scmp.eq.s32.totalorder %s9, 1
    %p110 = por %p108, %p109
    %p111 = scmp.ne.s32.totalorder %s103, %s106
    %p112 = scmp.eq.s32.totalorder %s9, 0
    %p113 = por %p111, %p112
    %p114 = scmp.ne.s32.totalorder %s103, %s106
    %p115 = scmp.eq.s32.totalorder %s14, 1
    %p116 = por %p114, %p115
    %p117 = scmp.ne.s32.totalorder %s106, %s107
    %p118 = scmp.eq.s32.totalorder %s14, 0
    %p119 = por %p117, %p118
    %p120 = scmp.ne.s32.totalorder %s106, %s107
    %p121 = scmp.eq.s32.totalorder %s15, 1
    %p122 = por %p120, %p121
    %p124 = scmp.ne.s32.totalorder %s107, %s123
    %p125 = scmp.eq.s32.totalorder %s15, 0
    %p126 = por %p124, %p125
    %p127 = scmp.le.s32.totalorder 1, %s9
    %p128 = scmp.lt.s32.totalorder %s9, 3
    %p129 = pnand %p127, %p128
    %p130 = pneg %p129
    // Predicated region
    $region9: #{tpu_custom_call.1} parent=5 // pred_check
      _
    $region10: #{tpu_custom_call.1} parent=5 // pred_check_branch
      %132 = sbr.rel (%p129) target = $region12
    $region11: #{tpu_custom_call.1} parent=5 // pred_region
      %s133 = ssub.s32 %s9, 1
      // Predicated region
      $region13: #{tpu_custom_call.1} parent=11 // pred_check
        %p134 = pneg %p70
      $region14: #{tpu_custom_call.1} parent=11 // pred_check_branch
        %136 = sbr.rel (%p134) target = $region16
      $region15: #{tpu_custom_call.1} parent=11 // pred_region
        _
      $region16: #{tpu_custom_call.1} parent=11 // pred_fallthru
        _
      // Predicated region
      $region17: #{tpu_custom_call.1} parent=11 // pred_check
        %p137 = pneg %p91
      $region18: #{tpu_custom_call.1} parent=11 // pred_check_branch
        %139 = sbr.rel (%p137) target = $region20
      $region19: #{tpu_custom_call.1} parent=11 // pred_region
        _
      $region20: #{tpu_custom_call.1} parent=11 // pred_fallthru
        _
    $region12: #{tpu_custom_call.1} parent=5 // pred_fallthru
      _
    %p140 = scmp.lt.s32.totalorder %s9, 2
    // Predicated region
    $region21: #{tpu_custom_call.1} parent=5 // pred_check
      %p141 = pneg %p140
    $region22: #{tpu_custom_call.1} parent=5 // pred_check_branch
      %143 = sbr.rel (%p141) target = $region24
    $region23: #{tpu_custom_call.1} parent=5 // pred_region
      // Predicated region
      $region25: #{tpu_custom_call.1} parent=23 // pred_check
        %p144 = pneg %p43
      $region26: #{tpu_custom_call.1} parent=23 // pred_check_branch
        %146 = sbr.rel (%p144) target = $region28
      $region27: #{tpu_custom_call.1} parent=23 // pred_region
        %p147 = scmp.lt.s32.totalorder %s16, 1
        %s148 = scalar_select %p147, %s16, 1
        %p149 = scmp.lt.s32.totalorder %s17, 0
        %s150 = scalar_select %p149, %s17, 0
        %s151 = sadd.s32 %s150, %s148
        %s152 = smul.addr %s151, 4
        %s153 = scalar_lea.vmem %s0, %s152
      $region28: #{tpu_custom_call.1} parent=23 // pred_fallthru
        _
    $region24: #{tpu_custom_call.1} parent=5 // pred_fallthru
      _
    %p154 = scmp.le.s32.totalorder 1, %s9
    %p155 = scmp.lt.s32.totalorder %s9, 3
    %p156 = pnand %p154, %p155
    %p157 = pneg %p156
    // Predicated region
    $region29: #{tpu_custom_call.1} parent=5 // pred_check
      _
    $region30: #{tpu_custom_call.1} parent=5 // pred_check_branch
      %159 = sbr.rel (%p156) target = $region32
    $region31: #{tpu_custom_call.1} parent=5 // pred_region
      %s160 = ssub.s32 %s9, 1
      %p161 = scmp.lt.s32.totalorder %s18, 1
      %s162 = scalar_select %p161, %s18, 1
      %p163 = scmp.lt.s32.totalorder %s19, 0
      %s164 = scalar_select %p163, %s19, 0
      %s165 = sadd.s32 %s164, %s162
      %s166 = smul.addr %s165, 4
      %s167 = scalar_lea.vmem %s0, %s166
      %p168 = pneg %p49
      %p169 = pneg %p46
      %p170 = pneg %p70
      %p171 = pneg %p67
      %p172 = pneg %p91
      %p173 = pneg %p88
      %p174 = pneg %p119
      %p175 = pneg %p116
      %p176 = scmp.lt.s32.totalorder %s18, 1
      %s177 = scalar_select %p176, %s18, 1
      %p178 = scmp.lt.s32.totalorder %s19, 0
      %s179 = scalar_select %p178, %s19, 0
      %s180 = sadd.s32 %s179, %s177
      %s181 = smul.addr %s180, 8
      %s182 = scalar_lea.vmem %s3, %s181
      %p183 = scmp.lt.s32.totalorder %s18, 1
      %s184 = scalar_select %p183, %s18, 1
      %p185 = scmp.lt.s32.totalorder %s19, 0
      %s186 = scalar_select %p185, %s19, 0
      %s187 = sadd.s32 %s186, %s184
      %s188 = smul.addr %s187, 4
      %s189 = scalar_lea.vmem %s0, %s188
      %p190 = scmp.lt.s32.totalorder %s18, 1
      %s191 = scalar_select %p190, %s18, 1
      %p192 = scmp.lt.s32.totalorder %s19, 0
      %s193 = scalar_select %p192, %s19, 0
      %s194 = sadd.s32 %s193, %s191
      %s195 = smul.addr %s194, 8
      %s196 = scalar_lea.vmem %s3, %s195
      %v197 = vld [vmem:[%s189] sm:$0xf]
      %v198 = vld [vmem:[%s1] sm:$0xff]
      %v199 = vld [vmem:[%s1 + $0x8] sm:$0xff]
      %v200 = vld [vmem:[%s1 + $0x10] sm:$0xff]
      %v201 = vld [vmem:[%s1 + $0x18] sm:$0xff]
      %v202 = vld [vmem:[%s1 + $0x20] sm:$0xff]
      %v203 = vld [vmem:[%s1 + $0x28] sm:$0xff]
      %v204 = vld [vmem:[%s1 + $0x30] sm:$0xff]
      %v205 = vld [vmem:[%s1 + $0x38] sm:$0xff]
      %v206 = vld [vmem:[%s1 + $0x40] sm:$0xff]
      %v207 = vld [vmem:[%s1 + $0x48] sm:$0xff]
      %v208 = vld [vmem:[%s1 + $0x50] sm:$0xff]
      %v209 = vld [vmem:[%s1 + $0x58] sm:$0xff]
      %v210 = vld [vmem:[%s1 + $0x60] sm:$0xff]
      %v211 = vld [vmem:[%s1 + $0x68] sm:$0xff]
      %v212 = vld [vmem:[%s1 + $0x70] sm:$0xff]
      %v213 = vld [vmem:[%s1 + $0x78] sm:$0xff]
      %vm214 = vcmask 31744
      %v216 = vsel %vm214, %v198, 0
      %v219 = vsel %vm214, %v199, 0
      %v222 = vsel %vm214, %v200, 0
      %v225 = vsel %vm214, %v201, 0
      %v228 = vsel %vm214, %v202, 0
      %v231 = vsel %vm214, %v203, 0
      %v234 = vsel %vm214, %v204, 0
      %v237 = vsel %vm214, %v205, 0
      %v240 = vsel %vm214, %v206, 0
      %v243 = vsel %vm214, %v207, 0
      %v246 = vsel %vm214, %v208, 0
      %v249 = vsel %vm214, %v209, 0
      %v252 = vsel %vm214, %v210, 0
      %v255 = vsel %vm214, %v211, 0
      %v258 = vsel %vm214, %v212, 0
      %v261 = vsel %vm214, %v213, 0
      %vm263 = vcmask 1043456
      %v265 = vsel %vm263, %v197, 0
      %267 = vmatpush.msra.mxu0 0.0
      %268 = vmatpush.msra.mxu0 0.0
      %269 = vmatpush.msra.mxu0 0.0
      %270 = vmatpush.msra.mxu0 0.0
      %271 = vmatpush.msra.mxu0 0.0
      %272 = vmatpush.msra.mxu0 0.0
      %273 = vmatpush.msra.mxu0 0.0
      %274 = vmatpush.msra.mxu0 0.0
      %275 = vmatpush.msra.mxu0 0.0
      %276 = vmatpush.msra.mxu0 0.0
      %277 = vmatpush.msra.mxu0 0.0
      %278 = vmatpush.msra.mxu0 0.0
      %279 = vmatpush.msra.mxu0 0.0
      %280 = vmatpush.msra.mxu0 0.0
      %281 = vmatpush.msra.mxu0 0.0
      %282 = vmatpush.msra.mxu0 %v265
      %283 = vmatmul.f32.gmra.mxu0 %v216
      %v284 = vpop.f32.mrf.mxu0
      %v285 = vadd.f32 0.0, %v284
      %286 = vmatmul.f32.gmra.mxu0 %v219
      %v287 = vpop.f32.mrf.mxu0
      %v288 = vadd.f32 0.0, %v287
      %289 = vmatmul.f32.gmra.mxu0 %v222
      %v290 = vpop.f32.mrf.mxu0
      %v291 = vadd.f32 0.0, %v290
      %292 = vmatmul.f32.gmra.mxu0 %v225
      %v293 = vpop.f32.mrf.mxu0
      %v294 = vadd.f32 0.0, %v293
      %295 = vmatmul.f32.gmra.mxu0 %v228
      %v296 = vpop.f32.mrf.mxu0
      %v297 = vadd.f32 0.0, %v296
      %298 = vmatmul.f32.gmra.mxu0 %v231
      %v299 = vpop.f32.mrf.mxu0
      %v300 = vadd.f32 0.0, %v299
      %301 = vmatmul.f32.gmra.mxu0 %v234
      %v302 = vpop.f32.mrf.mxu0
      %v303 = vadd.f32 0.0, %v302
      %304 = vmatmul.f32.gmra.mxu0 %v237
      %v305 = vpop.f32.mrf.mxu0
      %v306 = vadd.f32 0.0, %v305
      %307 = vmatmul.f32.gmra.mxu0 %v240
      %v308 = vpop.f32.mrf.mxu0
      %v309 = vadd.f32 0.0, %v308
      %310 = vmatmul.f32.gmra.mxu0 %v243
      %v311 = vpop.f32.mrf.mxu0
      %v312 = vadd.f32 0.0, %v311
      %313 = vmatmul.f32.gmra.mxu0 %v246
      %v314 = vpop.f32.mrf.mxu0
      %v315 = vadd.f32 0.0, %v314
      %316 = vmatmul.f32.gmra.mxu0 %v249
      %v317 = vpop.f32.mrf.mxu0
      %v318 = vadd.f32 0.0, %v317
      %319 = vmatmul.f32.gmra.mxu0 %v252
      %v320 = vpop.f32.mrf.mxu0
      %v321 = vadd.f32 0.0, %v320
      %322 = vmatmul.f32.gmra.mxu0 %v255
      %v323 = vpop.f32.mrf.mxu0
      %v324 = vadd.f32 0.0, %v323
      %325 = vmatmul.f32.gmra.mxu0 %v258
      %v326 = vpop.f32.mrf.mxu0
      %v327 = vadd.f32 0.0, %v326
      %328 = vmatmul.f32.gmra.mxu0 %v261
      %v329 = vpop.f32.mrf.mxu0
      %v330 = vadd.f32 0.0, %v329
      %331 = vdwg.mxu0
      %332 = vxpose.xlu0.b32.start [1/16] %v285, 128
      %333 = vxpose.xlu0.b32.cont [2/16] %v288, 128
      %334 = vxpose.xlu0.b32.cont [3/16] %v291, 128
      %335 = vxpose.xlu0.b32.cont [4/16] %v294, 128
      %336 = vxpose.xlu0.b32.cont [5/16] %v297, 128
      %337 = vxpose.xlu0.b32.cont [6/16] %v300, 128
      %338 = vxpose.xlu0.b32.cont [7/16] %v303, 128
      %339 = vxpose.xlu0.b32.cont [8/16] %v306, 128
      %340 = vxpose.xlu0.b32.cont [9/16] %v309, 128
      %341 = vxpose.xlu0.b32.cont [10/16] %v312, 128
      %342 = vxpose.xlu0.b32.cont [11/16] %v315, 128
      %343 = vxpose.xlu0.b32.cont [12/16] %v318, 128
      %344 = vxpose.xlu0.b32.cont [13/16] %v321, 128
      %345 = vxpose.xlu0.b32.cont [14/16] %v324, 128
      %346 = vxpose.xlu0.b32.cont [15/16] %v327, 128
      %347 = vxpose.xlu0.b32.end [16/16] %v330, 128
      %v348 = vpop.trf.xlu0
      %v349 = vpop.trf.xlu0
      %v350 = vpop.trf.xlu0
      %v351 = vpop.trf.xlu0
      %v352 = vpop.trf.xlu0
      %v353 = vpop.trf.xlu0
      %v354 = vpop.trf.xlu0
      %v355 = vpop.trf.xlu0
      %v356 = vpop.trf.xlu0
      %v357 = vpop.trf.xlu0
      %v358 = vpop.trf.xlu0
      %v359 = vpop.trf.xlu0
      %v360 = vpop.trf.xlu0
      %v361 = vpop.trf.xlu0
      %v362 = vpop.trf.xlu0
      %v363 = vpop.trf.xlu0
      %364 = vst [vmem:[#allocation2] sm:$0xff] %v348
      %365 = vst [vmem:[#allocation2 + $0x8] sm:$0xff] %v349
      %v366 = vld [vmem:[#allocation2] ss:$2 sm:$0xff]
      %s367 = scalar_lea.vmem [#allocation2], 1
      %v368 = vld [vmem:[%s367] ss:$2 sm:$0xff]
      %v369 = vmax.f32 %v366, %v368
      %v370 = vld [vmem:[%s2] sm:$0x1]
      %v372 = vperm.slane %v370, 0
      %v374 = vadd.f32 %v369, %v372
      %v375 = vmax.f32 %v374, 0.0
      %376 = vxpose.xlu0.b32.start [1/16] %v375, 128
      %377 = vxpose.xlu0.b32.cont [2/16] 0.0, 128
      %378 = vxpose.xlu0.b32.cont [3/16] 0.0, 128
      %379 = vxpose.xlu0.b32.cont [4/16] 0.0, 128
      %380 = vxpose.xlu0.b32.cont [5/16] 0.0, 128
      %381 = vxpose.xlu0.b32.cont [6/16] 0.0, 128
      %382 = vxpose.xlu0.b32.cont [7/16] 0.0, 128
      %383 = vxpose.xlu0.b32.cont [8/16] 0.0, 128
      %384 = vxpose.xlu0.b32.cont [9/16] 0.0, 128
      %385 = vxpose.xlu0.b32.cont [10/16] 0.0, 128
      %386 = vxpose.xlu0.b32.cont [11/16] 0.0, 128
      %387 = vxpose.xlu0.b32.cont [12/16] 0.0, 128
      %388 = vxpose.xlu0.b32.cont [13/16] 0.0, 128
      %389 = vxpose.xlu0.b32.cont [14/16] 0.0, 128
      %390 = vxpose.xlu0.b32.cont [15/16] 0.0, 128
      %391 = vxpose.xlu0.b32.end [16/16] 0.0, 128
      %v392 = vpop.trf.xlu0
      %v393 = vpop.trf.xlu0
      %v394 = vpop.trf.xlu0
      %v395 = vpop.trf.xlu0
      %v396 = vpop.trf.xlu0
      %v397 = vpop.trf.xlu0
      %v398 = vpop.trf.xlu0
      %v399 = vpop.trf.xlu0
      %v400 = vpop.trf.xlu0
      %v401 = vpop.trf.xlu0
      %v402 = vpop.trf.xlu0
      %v403 = vpop.trf.xlu0
      %v404 = vpop.trf.xlu0
      %v405 = vpop.trf.xlu0
      %v406 = vpop.trf.xlu0
      %v407 = vpop.trf.xlu0
      %vm408 = vcmask 62464
      %409 = vst.msk [vmem:[%s196] sm:$0x3f] %vm408, %v392
      %p410 = scmp.lt.s32.totalorder %s18, 1
      %s411 = scalar_select %p410, %s18, 1
      %p412 = scmp.lt.s32.totalorder %s19, 0
      %s413 = scalar_select %p412, %s19, 0
      %s414 = sadd.s32 %s413, %s411
      %s415 = smul.addr %s414, 8
      %s416 = scalar_lea.vmem %s3, %s415
      // Predicated region
      $region33: #{tpu_custom_call.1} parent=31 // pred_check
        %p417 = pneg %p116
      $region34: #{tpu_custom_call.1} parent=31 // pred_check_branch
        %419 = sbr.rel (%p417) target = $region36
      $region35: #{tpu_custom_call.1} parent=31 // pred_region
        _
      $region36: #{tpu_custom_call.1} parent=31 // pred_fallthru
        _
    $region32: #{tpu_custom_call.1} parent=5 // pred_fallthru
      _
    %p420 = scmp.le.s32.totalorder 2, %s9
    // Predicated region
    $region37: #{tpu_custom_call.1} parent=5 // pred_check
      %p421 = pneg %p420
    $region38: #{tpu_custom_call.1} parent=5 // pred_check_branch
      %423 = sbr.rel (%p421) target = $region40
    $region39: #{tpu_custom_call.1} parent=5 // pred_region
      %s424 = ssub.s32 %s9, 2
      // Predicated region
      $region41: #{tpu_custom_call.1} parent=39 // pred_check
        %p425 = pneg %p122
      $region42: #{tpu_custom_call.1} parent=39 // pred_check_branch
        %427 = sbr.rel (%p425) target = $region44
      $region43: #{tpu_custom_call.1} parent=39 // pred_region
        %p428 = scmp.lt.s32.totalorder %s20, 1
        %s429 = scalar_select %p428, %s20, 1
        %p430 = scmp.lt.s32.totalorder %s21, 0
        %s431 = scalar_select %p430, %s21, 0
        %s432 = sadd.s32 %s431, %s429
        %s433 = smul.addr %s432, 8
        %s434 = scalar_lea.vmem %s3, %s433
      $region44: #{tpu_custom_call.1} parent=39 // pred_fallthru
        _
    $region40: #{tpu_custom_call.1} parent=5 // pred_fallthru
      _
  $region6: #{tpu_custom_call.1} parent=0 // loop_footer
    %s13 = sadd.s32 1, %s9
  $region7: #{tpu_custom_call.1} parent=0 // loop_footer_branch
    %8 = sbr.rel target = $region3
  $region8: #{tpu_custom_call.1} parent=0 // loop_exit
    _

</llo_original>
